<compile_context>
chip_gen: v6e
topology: v6e:2x2x1
jax: 0.10.0
libtpu: 0.0.40
codegen_flags: <defaults>
</compile_context>

<pallas_src>
import jax
import jax.numpy as jnp
from jax.experimental import pallas as pl
from jax.experimental.pallas import tpu as pltpu


def critic_kernel(x_ref, w1_ref, b1_ref, w2_ref, b2_ref, o_ref):
    # x: [TB, D]  w1: [D, H]  b1: [1, H]  w2: [1, H]  b2: [1, 1]  o: [1, TB]
    # fc1 on the MXU, f32 accumulate; bias add + ReLU on the VPU.
    h = jnp.dot(x_ref[...], w1_ref[...], preferred_element_type=jnp.float32)
    h = jnp.maximum(h + b1_ref[...], 0.0)                     # [TB, H] f32

    # fc2: VPU elementwise multiply + XLU lane reduce (instead of an [H,1]
    # MXU matmul that would use <1% of the systolic array).
    v = jnp.sum(h * w2_ref[...], axis=-1)                     # [TB]

    # Lane-dense [1, TB] store (b2 broadcast on the VPU).
    o_ref[...] = (v[None, :] + b2_ref[...]).astype(o_ref.dtype)


def critic_forward(x, w1, b1, w2, b2, *, block_batch=512,
                   vmem_budget_bytes=48 * 1024 * 1024):
    """x: [B, D]; w1: [D, H]; b1: [1, H] or [H]; w2: [H, 1]; b2: [1, 1] or [1].

    Returns [B, 1] f32 == Critic.forward(x).
    """
    B, D = x.shape
    H = w1.shape[1]
    out_dim = w2.shape[1]
    assert out_dim == 1, "Critic value head has out_dim == 1"

    x_elt = x.dtype.itemsize
    w_elt = w1.dtype.itemsize

    # ---- Batch tile (TB) selection -------------------------------------
    if B <= block_batch:
        # Single tile sized to the real batch (rounded up to 8 sublanes):
        # avoids padding small batches to a 128/512-row tile of garbage.
        TB = ((max(B, 1) + 7) // 8) * 8
    else:
        assert block_batch % 128 == 0, "multi-tile TB must be a multiple of 128"
        TB = block_batch
        # Cap TB so (x double-buffer + resident weights) fits the per-core
        # VMEM budget (v7x has only 64 MiB/TC; v5e scoped default is 16 MiB).
        w_resident = D * H * w_elt + 4 * H * 4
        while TB > 128 and 2 * TB * D * x_elt + w_resident > vmem_budget_bytes:
            TB -= 128

    num_tiles = pl.cdiv(B, TB)       # on v7x, >=2 tiles lets both TCs work
    B_pad = num_tiles * TB
    if B_pad != B:
        x = jnp.pad(x, ((0, B_pad - B), (0, 0)))

    # ---- Layout plumbing done ONCE in the wrapper (never per grid step) --
    w2_row = w2.reshape(1, H).astype(jnp.float32)   # [H,1] -> lane-major row
    b1_row = b1.reshape(1, H).astype(jnp.float32)
    b2_sc = b2.reshape(1, 1).astype(jnp.float32)

    # ---- VMEM limit & cost estimate --------------------------------------
    vmem_need = (2 * TB * D * x_elt          # x double buffer
                 + D * H * w_elt             # w1 (single-buffered)
                 + 4 * H * 4 + 64            # b1 + w2 rows (+ b2)
                 + 2 * TB * 4)               # output row buffers
    vmem_limit = int(min(max(2 * vmem_need, 32 * 1024 * 1024),
                         64 * 1024 * 1024))

    cost = pl.CostEstimate(
        flops=2 * B_pad * D * H + 2 * B_pad * H,
        transcendentals=0,
        bytes_accessed=B_pad * D * x_elt + D * H * w_elt
                       + (2 * H + 1) * 4 + B_pad * 4,
    )

    const1 = pl.Buffered(1)   # weights/biases: same block every step -> single-buffer
    out_row = pl.pallas_call(
        critic_kernel,
        out_shape=jax.ShapeDtypeStruct((1, B_pad), jnp.float32),
        grid_spec=pl.GridSpec(
            grid=(num_tiles,),
            in_specs=[
                # x tiles stream (double-buffered) over the batch grid axis.
                pl.BlockSpec((TB, D), lambda i: (i, 0)),
                # VMEM-resident weights/biases, single-buffered.
                pl.BlockSpec((D, H), lambda i: (0, 0), pipeline_mode=const1),
                pl.BlockSpec((1, H), lambda i: (0, 0), pipeline_mode=const1),
                pl.BlockSpec((1, H), lambda i: (0, 0), pipeline_mode=const1),
                pl.BlockSpec((1, 1), lambda i: (0, 0), pipeline_mode=const1),
            ],
            # Lane-dense (1, B_pad) output: one [1, TB] block per grid step.
            out_specs=pl.BlockSpec((1, TB), lambda i: (0, i)),
        ),
        compiler_params=pltpu.CompilerParams(
            dimension_semantics=("parallel",),
            vmem_limit_bytes=vmem_limit),
        cost_estimate=cost,
    )(x, w1, b1_row, w2_row, b2_sc)

    # (1, B_pad) -> [B, 1]
    return out_row[0, :B].reshape(B, out_dim)


def init_critic_params(key, input_dim, hidden, out_dim=1):
    """Deterministic init mimicking nn.Linear's default U(-1/sqrt(fan_in), ...)."""
    k1, k2, k3, k4 = jax.random.split(key, 4)
    lim1 = 1.0 / (input_dim ** 0.5)
    lim2 = 1.0 / (hidden ** 0.5)
    # Stored already transposed: [in, out]
    w1 = jax.random.uniform(k1, (input_dim, hidden), jnp.float32, -lim1, lim1)
    b1 = jax.random.uniform(k2, (1, hidden), jnp.float32, -lim1, lim1)
    w2 = jax.random.uniform(k3, (hidden, out_dim), jnp.float32, -lim2, lim2)
    b2 = jax.random.uniform(k4, (1, out_dim), jnp.float32, -lim2, lim2)
    return w1, b1, w2, b2


if __name__ == "__main__":
    key = jax.random.PRNGKey(0)
    kx, kp = jax.random.split(key)

    batch, input_dim, hidden, out_dim = 8, 16, 32, 1
    x = jax.random.normal(kx, (batch, input_dim), jnp.float32)
    w1, b1, w2, b2 = init_critic_params(kp, input_dim, hidden, out_dim)

    out = critic_forward(x, w1, b1, w2, b2)
    jax.block_until_ready(out)

    # Pure-JAX reference of the same math.
    ref = jnp.maximum(x @ w1 + b1, 0.0) @ w2 + b2
    assert out.shape == (batch, out_dim)
    assert jnp.allclose(out, ref, atol=1e-4, rtol=1e-4)

    print("KERNEL_OK")
</pallas_src>

<mosaic_0001>
module attributes {stable_mosaic.version = 11 : i64} {
  func.func @critic_kernel(%arg0: i32, %arg1: memref<8x16xf32, #tpu.memory_space<vmem>>, %arg2: memref<16x32xf32, #tpu.memory_space<vmem>>, %arg3: memref<1x32xf32, #tpu.memory_space<vmem>>, %arg4: memref<1x32xf32, #tpu.memory_space<vmem>>, %arg5: memref<1x1xf32, #tpu.memory_space<vmem>>, %arg6: memref<1x8xf32, #tpu.memory_space<vmem>>) attributes {dimension_semantics = [#tpu.dimension_semantics<parallel>], iteration_bounds = array<i64: 1>, scalar_prefetch = 0 : i64, scratch_operands = 0 : i64, tpu.core_type = #tpu.core_type<tc>, window_params = [{transform_indices = @transform_0, window_bounds = array<i64: 8, 16>}, {pipeline_mode = #tpu.pipeline_mode<synchronous>, transform_indices = @transform_1, window_bounds = array<i64: 16, 32>}, {pipeline_mode = #tpu.pipeline_mode<synchronous>, transform_indices = @transform_2, window_bounds = array<i64: 1, 32>}, {pipeline_mode = #tpu.pipeline_mode<synchronous>, transform_indices = @transform_3, window_bounds = array<i64: 1, 32>}, {pipeline_mode = #tpu.pipeline_mode<synchronous>, transform_indices = @transform_4, window_bounds = array<i64: 1, 1>}, {transform_indices = @transform_5, window_bounds = array<i64: 1, 8>}]} {
    %c0 = arith.constant 0 : index
    %c0_0 = arith.constant 0 : index
    %0 = vector.load %arg1[%c0, %c0_0] : memref<8x16xf32, #tpu.memory_space<vmem>>, vector<8x16xf32>
    %c0_1 = arith.constant 0 : index
    %c0_2 = arith.constant 0 : index
    %1 = vector.load %arg2[%c0_1, %c0_2] : memref<16x32xf32, #tpu.memory_space<vmem>>, vector<16x32xf32>
    %cst = arith.constant dense<0.000000e+00> : vector<8x32xf32>
    %2 = tpu.matmul %0, %1, %cst {dimension_numbers = #tpu.dot_dimension_numbers<[1], [0], [0], [1], [0, 0, 1, 1], [], []>} : vector<8x16xf32>, vector<16x32xf32>, vector<8x32xf32> -> vector<8x32xf32>
    %c0_3 = arith.constant 0 : index
    %c0_4 = arith.constant 0 : index
    %3 = vector.load %arg3[%c0_3, %c0_4] : memref<1x32xf32, #tpu.memory_space<vmem>>, vector<1x32xf32>
    %4 = vector.broadcast %3 : vector<1x32xf32> to vector<8x32xf32>
    %5 = arith.addf %2, %4 : vector<8x32xf32>
    %cst_5 = arith.constant 0.000000e+00 : f32
    %6 = vector.broadcast %cst_5 : f32 to vector<8x32xf32>
    %7 = arith.maximumf %5, %6 : vector<8x32xf32>
    %c0_6 = arith.constant 0 : index
    %c0_7 = arith.constant 0 : index
    %8 = vector.load %arg4[%c0_6, %c0_7] : memref<1x32xf32, #tpu.memory_space<vmem>>, vector<1x32xf32>
    %9 = vector.broadcast %8 : vector<1x32xf32> to vector<8x32xf32>
    %10 = arith.mulf %7, %9 : vector<8x32xf32>
    %cst_8 = arith.constant dense<0.000000e+00> : vector<8xf32>
    %11 = vector.multi_reduction <add>, %10, %cst_8 [1] : vector<8x32xf32> to vector<8xf32>
    %12 = vector.shape_cast %11 : vector<8xf32> to vector<1x8xf32>
    %c0_9 = arith.constant 0 : index
    %c0_10 = arith.constant 0 : index
    %13 = vector.load %arg5[%c0_9, %c0_10] : memref<1x1xf32, #tpu.memory_space<vmem>>, vector<1x1xf32>
    %14 = vector.broadcast %13 : vector<1x1xf32> to vector<1x8xf32>
    %15 = arith.addf %12, %14 : vector<1x8xf32>
    %c0_11 = arith.constant 0 : index
    %c0_12 = arith.constant 0 : index
    %16 = vector.load %arg6[%c0_11, %c0_12] : memref<1x8xf32, #tpu.memory_space<vmem>>, vector<1x8xf32>
    tpu.vector_store %arg6[%c0_11, %c0_12], %15 {strides = array<i32>} : memref<1x8xf32, #tpu.memory_space<vmem>>, vector<1x8xf32>,
    return
  }
  func.func @transform_0(%arg0: i32) -> (i32, i32) {
    %c0_i32 = arith.constant 0 : i32
    %c0_i32_0 = arith.constant 0 : i32
    return %arg0, %c0_i32 : i32, i32
  }
  func.func @transform_1(%arg0: i32) -> (i32, i32) {
    %c0_i32 = arith.constant 0 : i32
    %c0_i32_0 = arith.constant 0 : i32
    %c0_i32_1 = arith.constant 0 : i32
    return %c0_i32, %c0_i32_0 : i32, i32
  }
  func.func @transform_2(%arg0: i32) -> (i32, i32) {
    %c0_i32 = arith.constant 0 : i32
    %c0_i32_0 = arith.constant 0 : i32
    %c0_i32_1 = arith.constant 0 : i32
    return %c0_i32, %c0_i32_0 : i32, i32
  }
  func.func @transform_3(%arg0: i32) -> (i32, i32) {
    %c0_i32 = arith.constant 0 : i32
    %c0_i32_0 = arith.constant 0 : i32
    %c0_i32_1 = arith.constant 0 : i32
    return %c0_i32, %c0_i32_0 : i32, i32
  }
  func.func @transform_4(%arg0: i32) -> (i32, i32) {
    %c0_i32 = arith.constant 0 : i32
    %c0_i32_0 = arith.constant 0 : i32
    %c0_i32_1 = arith.constant 0 : i32
    return %c0_i32, %c0_i32_0 : i32, i32
  }
  func.func @transform_5(%arg0: i32) -> (i32, i32) {
    %c0_i32 = arith.constant 0 : i32
    %c0_i32_0 = arith.constant 0 : i32
    return %c0_i32, %arg0 : i32, i32
  }
}

</mosaic_0001>

<llo_original>
// kernel: tpu_custom_call.1
$region0: #{tpu_custom_call.1}
  #allocation0 [shape = 'u32[]', space=smem, size = 0x4, offset = 0x4, fixed_abs, tag = 'smem constant byte address 0x4 - core index']
  #allocation1 [shape = 'u32[144,128]{1,0:T(1,128)}', space=vmem, size = 0x12000, scoped, tag = 'internal scratch']
  #allocation2 [shape = 'f32[1,1]{1,0:T(1,128)S(1)}', space=vmem, size = 0x200, scoped, tag = 'scoped memory for tpu_custom_call.1']
  %s0 = inlined_call_operand.hbm [shape: f32[8,16], index: 0, kind: input, shape index: {}]
  %s1 = inlined_call_operand.hbm [shape: f32[16,32], index: 1, kind: input, shape index: {}]
  %s2 = inlined_call_operand.vmem [shape: f32[1,32], index: 2, kind: input, shape index: {}]
  %s3 = inlined_call_operand.vmem [shape: f32[1,32], index: 3, kind: input, shape index: {}]
  %s4 = inlined_call_operand.<no memory space> [shape: f32[1,1], index: 4, kind: input, shape index: {}]
  %s5 = inlined_call_operand.hbm [shape: f32[1,8], index: 5, kind: output, shape index: {}]
  %s6 = sld [smem:[#allocation0]]
  $region38: #{tpu_custom_call.1} parent=0
    _
  %s8 = ssub.s32 1, %s6
  %s9 = scalar_select 0, %s8, %s6
  %v10 = vstv %s4
  %11 = vst [vmem:[#allocation2] sm:$0x1] %v10
  $region1: #{tpu_custom_call.1} parent=0
    #allocation3 [shape = 'u8[4096]{0}', space=vmem, size = 0x1000, scoped, tag = 'input window, operand 0, single buffered']
    #allocation4 [shape = 's32[1]{0}', space=sflag, size = 0x4, scoped, tag = 'scoped memory for tpu_custom_call.1']
    #allocation5 [shape = 's32[1]{0}', space=sflag, size = 0x4, scoped, tag = 'scoped memory for tpu_custom_call.1']
    #allocation6 [shape = 'u8[8192]{0}', space=vmem, size = 0x2000, scoped, tag = 'input window, operand 1, single buffered']
    #allocation7 [shape = 's32[1]{0}', space=sflag, size = 0x4, scoped, tag = 'scoped memory for tpu_custom_call.1']
    #allocation8 [shape = 'u8[512]{0}', space=vmem, size = 0x400, scoped, tag = 'output window, operand 0, single buffered']
    %12 = vsyncpa [#allocation4], 0
    %13 = vsyncpa [#allocation7], 0
    %14 = vsyncpa [#allocation5], 0
    // Predicated region
    $region2: #{tpu_custom_call.1} parent=1 // pred_check
      _
    $region3: #{tpu_custom_call.1} parent=1 // pred_check_branch
      %16 = sbr.rel (0) target = $region5
    $region4: #{tpu_custom_call.1} parent=1 // pred_region
      %s18 = ssub.s32 128, 128
      %19 = vsyncadd [#allocation4], %s18
      %s21 = sshll.u32 [#allocation3], 4
      %s22 = int_to_ptr.vmem [resolvable:$true] %s21
      %24 = dma.hbm_to_vmem [thread:$0]  %s0, 128, %s22, [#allocation4]
    $region5: #{tpu_custom_call.1} parent=1 // pred_fallthru
      _
    // Predicated region
    $region6: #{tpu_custom_call.1} parent=1 // pred_check
      _
    $region7: #{tpu_custom_call.1} parent=1 // pred_check_branch
      %26 = sbr.rel (0) target = $region9
    $region8: #{tpu_custom_call.1} parent=1 // pred_region
      %s28 = ssub.s32 256, 256
      %29 = vsyncadd [#allocation7], %s28
      %s30 = sshll.u32 [#allocation6], 4
      %s31 = int_to_ptr.vmem [resolvable:$true] %s30
      %36 = dma.hbm_to_vmem [thread:$0]  %s1, 256, %s31, [#allocation7], 128, 128, 8
    $region9: #{tpu_custom_call.1} parent=1 // pred_fallthru
      _
    // Predicated region
    $region10: #{tpu_custom_call.1} parent=1 // pred_check
      _
    $region11: #{tpu_custom_call.1} parent=1 // pred_check_branch
      %38 = sbr.rel (0) target = $region13
    $region12: #{tpu_custom_call.1} parent=1 // pred_region
      _
    $region13: #{tpu_custom_call.1} parent=1 // pred_fallthru
      _
    // Predicated region
    $region14: #{tpu_custom_call.1} parent=1 // pred_check
      _
    $region15: #{tpu_custom_call.1} parent=1 // pred_check_branch
      %40 = sbr.rel (0) target = $region17
    $region16: #{tpu_custom_call.1} parent=1 // pred_region
      _
    $region17: #{tpu_custom_call.1} parent=1 // pred_fallthru
      _
    // Predicated region
    $region18: #{tpu_custom_call.1} parent=1 // pred_check
      _
    $region19: #{tpu_custom_call.1} parent=1 // pred_check_branch
      %42 = sbr.rel (0) target = $region21
    $region20: #{tpu_custom_call.1} parent=1 // pred_region
      _
    $region21: #{tpu_custom_call.1} parent=1 // pred_fallthru
      _
    // Predicated region
    $region22: #{tpu_custom_call.1} parent=1 // pred_check
      _
    $region23: #{tpu_custom_call.1} parent=1 // pred_check_branch
      %44 = sbr.rel (0) target = $region25
    $region24: #{tpu_custom_call.1} parent=1 // pred_region
      %45 = dma.done [#allocation4], 128
    $region25: #{tpu_custom_call.1} parent=1 // pred_fallthru
      _
    // Predicated region
    $region26: #{tpu_custom_call.1} parent=1 // pred_check
      _
    $region27: #{tpu_custom_call.1} parent=1 // pred_check_branch
      %47 = sbr.rel (0) target = $region29
    $region28: #{tpu_custom_call.1} parent=1 // pred_region
      %48 = dma.done [#allocation7], 256
    $region29: #{tpu_custom_call.1} parent=1 // pred_fallthru
      _
    %v49 = vld [vmem:[#allocation3] sm:$0xff]
    %v50 = vld [vmem:[#allocation6] sm:$0xff]
    %v51 = vld [vmem:[#allocation6 + $0x8] sm:$0xff]
    %v52 = vld [vmem:[%s2] sm:$0x1]
    %v54 = vlaneseq
    %v55 = vshrl.u32 %v54, 7
    %v56 = vsub.s32 0, %v55
    %v57 = vrot.slane %v52, %v56
    %vm59 = vcmask 130048
    %v61 = vsel %vm59, %v49, 0
    %63 = vmatprep.subr.mxu0 0.0
    %64 = vmatpush1.msra.mxu0 0.0
    %65 = vmatprep.subr.mxu0 0.0
    %66 = vmatpush1.msra.mxu0 0.0
    %67 = vmatprep.subr.mxu0 0.0
    %68 = vmatpush1.msra.mxu0 0.0
    %69 = vmatprep.subr.mxu0 0.0
    %70 = vmatpush1.msra.mxu0 0.0
    %71 = vmatprep.subr.mxu0 0.0
    %72 = vmatpush1.msra.mxu0 0.0
    %73 = vmatprep.subr.mxu0 0.0
    %74 = vmatpush1.msra.mxu0 0.0
    %75 = vmatprep.subr.mxu0 0.0
    %76 = vmatpush1.msra.mxu0 0.0
    %77 = vmatprep.subr.mxu0 0.0
    %78 = vmatpush1.msra.mxu0 0.0
    %79 = vmatprep.subr.mxu0 0.0
    %80 = vmatpush1.msra.mxu0 0.0
    %81 = vmatprep.subr.mxu0 0.0
    %82 = vmatpush1.msra.mxu0 0.0
    %83 = vmatprep.subr.mxu0 0.0
    %84 = vmatpush1.msra.mxu0 0.0
    %85 = vmatprep.subr.mxu0 0.0
    %86 = vmatpush1.msra.mxu0 0.0
    %87 = vmatprep.subr.mxu0 0.0
    %88 = vmatpush1.msra.mxu0 0.0
    %89 = vmatprep.subr.mxu0 0.0
    %90 = vmatpush1.msra.mxu0 0.0
    %91 = vmatprep.subr.mxu0 0.0
    %92 = vmatpush1.msra.mxu0 %v51
    %93 = vmatprep.subr.mxu0 0.0
    %94 = vmatpush1.msra.mxu0 %v50
    %95 = vmatprep.subr.mxu0 0.0
    %96 = vmatpush2.msra.mxu0 0.0
    %97 = vmatprep.subr.mxu0 0.0
    %98 = vmatpush2.msra.mxu0 0.0
    %99 = vmatprep.subr.mxu0 0.0
    %100 = vmatpush2.msra.mxu0 0.0
    %101 = vmatprep.subr.mxu0 0.0
    %102 = vmatpush2.msra.mxu0 0.0
    %103 = vmatprep.subr.mxu0 0.0
    %104 = vmatpush2.msra.mxu0 0.0
    %105 = vmatprep.subr.mxu0 0.0
    %106 = vmatpush2.msra.mxu0 0.0
    %107 = vmatprep.subr.mxu0 0.0
    %108 = vmatpush2.msra.mxu0 0.0
    %109 = vmatprep.subr.mxu0 0.0
    %110 = vmatpush2.msra.mxu0 0.0
    %111 = vmatprep.subr.mxu0 0.0
    %112 = vmatpush2.msra.mxu0 0.0
    %113 = vmatprep.subr.mxu0 0.0
    %114 = vmatpush2.msra.mxu0 0.0
    %115 = vmatprep.subr.mxu0 0.0
    %116 = vmatpush2.msra.mxu0 0.0
    %117 = vmatprep.subr.mxu0 0.0
    %118 = vmatpush2.msra.mxu0 0.0
    %119 = vmatprep.subr.mxu0 0.0
    %120 = vmatpush2.msra.mxu0 0.0
    %121 = vmatprep.subr.mxu0 0.0
    %122 = vmatpush2.msra.mxu0 0.0
    %123 = vmatprep.subr.mxu0 0.0
    %124 = vmatpush2.msra.mxu0 0.0
    %125 = vmatprep.subr.mxu0 0.0
    %126 = vmatpush2.msra.mxu0 0.0
    %127 = vmatprep.mubr.f32.mxu0 0.0
    %128 = vmatmul.mubr.f32.gmra.mxu0 %v61
    %v129 = vpop.f32.mrf.mxu0
    %v130 = vadd.f32 %v57, %v129
    %v131 = vpop.f32.mrf.mxu0
    %132 = vdwg.mxu0
    %v133 = vmax.f32 %v130, 0.0
    %v134 = vld [vmem:[%s3] sm:$0x1]
    %v136 = vlaneseq
    %v137 = vshrl.u32 %v136, 7
    %v138 = vsub.s32 0, %v137
    %v139 = vrot.slane %v134, %v138
    %v141 = vmul.f32 %v133, %v139
    %vm142 = vcmask 261120
    %v143 = vsel %vm142, %v141, 0.0
    %144 = vadd.xlane.f32.xlu0 %v143
    %v145 = vpop.xlane.xlu0 %144
    %v146 = vld [vmem:[#allocation2] sm:$0x1]
    %148 = vset.pattern.permute.xlu0 0
    %149 = vperm.xlu0 %148, %v146
    %v150 = vpop.permute.xlu0 %149
    %v152 = vlaneseq
    %v153 = vshrl.u32 %v152, 7
    %v154 = vsub.s32 0, %v153
    %v155 = vrot.slane %v150, %v154
    %v156 = vadd.f32 %v145, %v155
    %v158 = vlaneseq
    %v159 = vand.u32 %v158, 127
    %v160 = vlaneseq
    %v161 = vshrl.u32 %v160, 7
    %v162 = vsub.s32 %v159, %v161
    %v163 = vrot.slane %v156, %v162
    %vm165 = vcmask 57344
    %166 = vst.msk [vmem:[#allocation8] sm:$0x1] %vm165, %v163
    // Predicated region
    $region30: #{tpu_custom_call.1} parent=1 // pred_check
      _
    $region31: #{tpu_custom_call.1} parent=1 // pred_check_branch
      %168 = sbr.rel (0) target = $region33
    $region32: #{tpu_custom_call.1} parent=1 // pred_region
      %s170 = ssub.s32 16, 16
      %171 = vsyncadd [#allocation5], %s170
      %s173 = sshll.u32 [#allocation8], 4
      %s174 = int_to_ptr.vmem [resolvable:$true] %s173
      %176 = dma.vmem_to_hbm [thread:$0]  %s174, 16, %s5, [#allocation5]
    $region33: #{tpu_custom_call.1} parent=1 // pred_fallthru
      _
    // Predicated region
    $region34: #{tpu_custom_call.1} parent=1 // pred_check
      _
    $region35: #{tpu_custom_call.1} parent=1 // pred_check_branch
      %178 = sbr.rel (0) target = $region37
    $region36: #{tpu_custom_call.1} parent=1 // pred_region
      %179 = dma.done [#allocation5], 16
    $region37: #{tpu_custom_call.1} parent=1 // pred_fallthru
      _
    %180 = vsyncpa [#allocation4], 1
    %181 = vsyncpa [#allocation7], 1
    %182 = vsyncpa [#allocation5], 1

</llo_original>
